<compile_context>
chip_gen: v6e
topology: v6e:2x2x1
jax: 0.10.0
libtpu: 0.0.40
codegen_flags: <defaults>
</compile_context>

<pallas_src>
import functools

import jax
import jax.numpy as jnp
from jax.experimental import pallas as pl
from jax.experimental.pallas import tpu as pltpu

_NEG_BIG = -1e30  # bias for padded class lanes: never wins the max, exp -> 0


def _round_up(n, m):
    return (n + m - 1) // m * m


def _mlp_kernel(x_ref, w1_ref, b1_ref, w2_ref, b2_ref, o_ref, *, nr_classes):
    # fc1: cast the f32 input tile to bf16 at the MXU boundary, f32 accumulate.
    h = jnp.dot(x_ref[...].astype(jnp.bfloat16), w1_ref[...],
                preferred_element_type=jnp.float32)
    h = jnp.maximum(h + b1_ref[...], 0.0)
    # fc2: (TB, Hp)bf16 @ (Hp, Cp)bf16 -> f32.
    logits = jnp.dot(h.astype(jnp.bfloat16), w2_ref[...],
                     preferred_element_type=jnp.float32)
    logits = logits + b2_ref[...]
    # LogSoftmax over the lane-dense padded class dim; padded lanes carry a
    # -1e30 bias so they contribute exactly 0 to the sum and never win the max.
    m = jnp.max(logits, axis=-1, keepdims=True)
    shifted = logits - m
    lse = jnp.log(jnp.sum(jnp.exp(shifted), axis=-1, keepdims=True))
    # Store only the real classes: masked narrow store, 12.8x fewer HBM bytes
    # than writing the padded 128-lane f32 slab.
    o_ref[...] = (shifted - lse)[:, :nr_classes]


def prepare_params(w1, b1, w2, b2, input_shape):
    """One-time padding/casting of the weights (hoisted out of the fwd path)."""
    hidden = w1.shape[1]
    nr_classes = w2.shape[1]
    hp = _round_up(hidden, 128)      # 200 -> 256: matches the 256-wide MXU
    cp = _round_up(nr_classes, 128)  # 10  -> 128: lane-dense softmax reduction
    w1p = (jnp.zeros((input_shape, hp), jnp.float32)
           .at[:, :hidden].set(w1).astype(jnp.bfloat16))
    b1p = jnp.zeros((1, hp), jnp.float32).at[:, :hidden].set(
        jnp.asarray(b1, jnp.float32).reshape(1, -1))
    w2p = (jnp.zeros((hp, cp), jnp.float32)
           .at[:hidden, :nr_classes].set(w2).astype(jnp.bfloat16))
    b2p = jnp.full((1, cp), _NEG_BIG, jnp.float32).at[:, :nr_classes].set(
        jnp.asarray(b2, jnp.float32).reshape(1, -1))
    return w1p, b1p, w2p, b2p


@functools.partial(jax.jit, static_argnames=("input_shape", "nr_classes"))
def mlp_forward(x, w1p, b1p, w2p, b2p, *, input_shape, nr_classes):
    # Glue: flatten like torch's x.view(-1, input_shape).  No pad/cast copy.
    x2d = x.reshape(-1, input_shape)
    if x2d.dtype != jnp.float32:
        x2d = x2d.astype(jnp.float32)
    batch = x2d.shape[0]
    hp = w1p.shape[1]
    cp = w2p.shape[1]

    # ---- batch tiling ----
    # Big tiles amortize the ~0.35us/grid-step overhead; once the batch is
    # large enough, cap the tile so there are >= 2 grid steps and the
    # "parallel" axis can shard across v7x's two TensorCores.  The ragged last
    # tile (batch % tile_b != 0) is handled by Pallas edge masking.
    tile_b = min(2048, _round_up(batch, 8))
    if batch > 256:
        tile_b = min(tile_b, _round_up(pl.cdiv(batch, 2), 8))
    grid = (pl.cdiv(batch, tile_b),)

    flops = 2 * batch * (input_shape * hp + hp * cp)
    bytes_accessed = (batch * input_shape * 4          # x (f32, read once)
                      + w1p.size * 2 + w2p.size * 2    # bf16 weights
                      + b1p.size * 4 + b2p.size * 4
                      + batch * nr_classes * 4)        # narrow f32 output

    return pl.pallas_call(
        functools.partial(_mlp_kernel, nr_classes=nr_classes),
        out_shape=jax.ShapeDtypeStruct((batch, nr_classes), jnp.float32),
        grid=grid,
        in_specs=[
            pl.BlockSpec((tile_b, input_shape), lambda i: (i, 0)),  # x tile
            pl.BlockSpec((input_shape, hp), lambda i: (0, 0)),      # w1 resident
            pl.BlockSpec((1, hp), lambda i: (0, 0)),                # b1 resident
            pl.BlockSpec((hp, cp), lambda i: (0, 0)),               # w2 resident
            pl.BlockSpec((1, cp), lambda i: (0, 0)),                # b2 resident
        ],
        out_specs=pl.BlockSpec((tile_b, nr_classes), lambda i: (i, 0)),
        compiler_params=pltpu.CompilerParams(
            dimension_semantics=("parallel",)),
        cost_estimate=pl.CostEstimate(
            flops=flops,
            transcendentals=batch * cp,
            bytes_accessed=bytes_accessed),
    )(x2d, w1p, b1p, w2p, b2p)


def init_params(key, input_shape, hidden, nr_classes):
    """Deterministic PyTorch-style (uniform +/- 1/sqrt(fan_in)) init.

    Stored as (in, out) = transpose of PyTorch's (out, in) weight layout so the
    kernel runs plain row-major matmuls.
    """
    k1, k2, k3, k4 = jax.random.split(key, 4)
    bound1 = 1.0 / jnp.sqrt(jnp.float32(input_shape))
    bound2 = 1.0 / jnp.sqrt(jnp.float32(hidden))
    w1 = jax.random.uniform(k1, (input_shape, hidden), jnp.float32, -bound1, bound1)
    b1 = jax.random.uniform(k2, (1, hidden), jnp.float32, -bound1, bound1)
    w2 = jax.random.uniform(k3, (hidden, nr_classes), jnp.float32, -bound2, bound2)
    b2 = jax.random.uniform(k4, (1, nr_classes), jnp.float32, -bound2, bound2)
    return w1, b1, w2, b2


def reference_forward_bf16(x, w1, b1, w2, b2, input_shape):
    """Pure-JAX reference with the same bf16-operand / f32-accumulate math."""
    x2d = x.reshape(-1, input_shape).astype(jnp.float32)
    h = jnp.dot(x2d.astype(jnp.bfloat16), w1.astype(jnp.bfloat16),
                preferred_element_type=jnp.float32) + b1
    h = jnp.maximum(h, 0.0)
    logits = jnp.dot(h.astype(jnp.bfloat16), w2.astype(jnp.bfloat16),
                     preferred_element_type=jnp.float32) + b2
    m = jnp.max(logits, axis=-1, keepdims=True)
    shifted = logits - m
    return shifted - jnp.log(jnp.sum(jnp.exp(shifted), axis=-1, keepdims=True))


def reference_forward_f32(x, w1, b1, w2, b2, input_shape):
    x2d = x.reshape(-1, input_shape)
    h = jnp.maximum(x2d @ w1 + b1, 0.0)
    logits = h @ w2 + b2
    return jax.nn.log_softmax(logits, axis=-1)


if __name__ == "__main__":
    # Small shapes consistent with the module: model(input_shape=256, nr_classes=10)
    INPUT_SHAPE = 256
    HIDDEN = 200
    NR_CLASSES = 10
    BATCH = 8

    key = jax.random.PRNGKey(0)
    kx, kp = jax.random.split(key)
    # Input provided as (batch, 1, 16, 16) to exercise the view(-1, input_shape) path.
    x = jax.random.normal(kx, (BATCH, 1, 16, 16), jnp.float32)
    w1, b1, w2, b2 = init_params(kp, INPUT_SHAPE, HIDDEN, NR_CLASSES)

    # One-time weight preparation (padding + bf16 cast), outside the fwd path.
    w1p, b1p, w2p, b2p = prepare_params(w1, b1, w2, b2, INPUT_SHAPE)

    out = mlp_forward(x, w1p, b1p, w2p, b2p,
                      input_shape=INPUT_SHAPE, nr_classes=NR_CLASSES)
    jax.block_until_ready(out)
    assert out.shape == (BATCH, NR_CLASSES)
    assert bool(jnp.all(jnp.isfinite(out)))

    # Exact-math check against a reference using the same bf16 operand rounding.
    ref_bf16 = reference_forward_bf16(x, w1, b1, w2, b2, INPUT_SHAPE)
    assert jnp.allclose(out, ref_bf16, atol=1e-4, rtol=1e-4), "mismatch vs bf16 reference"

    # Loose sanity check against the full-f32 PyTorch-equivalent math.
    ref_f32 = reference_forward_f32(x, w1, b1, w2, b2, INPUT_SHAPE)
    assert jnp.allclose(out, ref_f32, atol=1e-1, rtol=1e-1), "mismatch vs f32 reference"

    print("KERNEL_OK")
</pallas_src>

<mosaic_0001>
module attributes {stable_mosaic.version = 11 : i64} {
  func.func @_mlp_kernel(%arg0: i32, %arg1: memref<8x256xf32, #tpu.memory_space<vmem>>, %arg2: memref<256x256xbf16, #tpu.memory_space<vmem>>, %arg3: memref<1x256xf32, #tpu.memory_space<vmem>>, %arg4: memref<256x128xbf16, #tpu.memory_space<vmem>>, %arg5: memref<1x128xf32, #tpu.memory_space<vmem>>, %arg6: memref<8x10xf32, #tpu.memory_space<vmem>>) attributes {dimension_semantics = [#tpu.dimension_semantics<parallel>], iteration_bounds = array<i64: 1>, scalar_prefetch = 0 : i64, scratch_operands = 0 : i64, tpu.core_type = #tpu.core_type<tc>, window_params = [{transform_indices = @transform_0, window_bounds = array<i64: 8, 256>}, {pipeline_mode = #tpu.pipeline_mode<synchronous>, transform_indices = @transform_1, window_bounds = array<i64: 256, 256>}, {pipeline_mode = #tpu.pipeline_mode<synchronous>, transform_indices = @transform_2, window_bounds = array<i64: 1, 256>}, {pipeline_mode = #tpu.pipeline_mode<synchronous>, transform_indices = @transform_3, window_bounds = array<i64: 256, 128>}, {pipeline_mode = #tpu.pipeline_mode<synchronous>, transform_indices = @transform_4, window_bounds = array<i64: 1, 128>}, {transform_indices = @transform_5, window_bounds = array<i64: 8, 10>}]} {
    %c0 = arith.constant 0 : index
    %c0_0 = arith.constant 0 : index
    %0 = vector.load %arg1[%c0, %c0_0] : memref<8x256xf32, #tpu.memory_space<vmem>>, vector<8x256xf32>
    %1 = arith.truncf %0 : vector<8x256xf32> to vector<8x256xbf16>
    %c0_1 = arith.constant 0 : index
    %c0_2 = arith.constant 0 : index
    %2 = vector.load %arg2[%c0_1, %c0_2] : memref<256x256xbf16, #tpu.memory_space<vmem>>, vector<256x256xbf16>
    %cst = arith.constant dense<0.000000e+00> : vector<8x256xf32>
    %3 = tpu.matmul %1, %2, %cst {dimension_numbers = #tpu.dot_dimension_numbers<[1], [0], [0], [1], [0, 0, 1, 1], [], []>} : vector<8x256xbf16>, vector<256x256xbf16>, vector<8x256xf32> -> vector<8x256xf32>
    %c0_3 = arith.constant 0 : index
    %c0_4 = arith.constant 0 : index
    %4 = vector.load %arg3[%c0_3, %c0_4] : memref<1x256xf32, #tpu.memory_space<vmem>>, vector<1x256xf32>
    %5 = vector.broadcast %4 : vector<1x256xf32> to vector<8x256xf32>
    %6 = arith.addf %3, %5 : vector<8x256xf32>
    %cst_5 = arith.constant 0.000000e+00 : f32
    %7 = vector.broadcast %cst_5 : f32 to vector<8x256xf32>
    %8 = arith.maximumf %6, %7 : vector<8x256xf32>
    %9 = arith.truncf %8 : vector<8x256xf32> to vector<8x256xbf16>
    %c0_6 = arith.constant 0 : index
    %c0_7 = arith.constant 0 : index
    %10 = vector.load %arg4[%c0_6, %c0_7] : memref<256x128xbf16, #tpu.memory_space<vmem>>, vector<256x128xbf16>
    %cst_8 = arith.constant dense<0.000000e+00> : vector<8x128xf32>
    %11 = tpu.matmul %9, %10, %cst_8 {dimension_numbers = #tpu.dot_dimension_numbers<[1], [0], [0], [1], [0, 0, 1, 1], [], []>} : vector<8x256xbf16>, vector<256x128xbf16>, vector<8x128xf32> -> vector<8x128xf32>
    %c0_9 = arith.constant 0 : index
    %c0_10 = arith.constant 0 : index
    %12 = vector.load %arg5[%c0_9, %c0_10] : memref<1x128xf32, #tpu.memory_space<vmem>>, vector<1x128xf32>
    %13 = vector.broadcast %12 : vector<1x128xf32> to vector<8x128xf32>
    %14 = arith.addf %11, %13 : vector<8x128xf32>
    %cst_11 = arith.constant dense<0xFF800000> : vector<8xf32>
    %15 = vector.multi_reduction <maximumf>, %14, %cst_11 [1] : vector<8x128xf32> to vector<8xf32>
    %16 = vector.shape_cast %15 : vector<8xf32> to vector<8x1xf32>
    %17 = vector.broadcast %16 : vector<8x1xf32> to vector<8x128xf32>
    %18 = arith.subf %14, %17 : vector<8x128xf32>
    %19 = math.exp %18 : vector<8x128xf32>
    %cst_12 = arith.constant dense<0.000000e+00> : vector<8xf32>
    %20 = vector.multi_reduction <add>, %19, %cst_12 [1] : vector<8x128xf32> to vector<8xf32>
    %21 = vector.shape_cast %20 : vector<8xf32> to vector<8x1xf32>
    %22 = math.log %21 : vector<8x1xf32>
    %23 = vector.broadcast %22 : vector<8x1xf32> to vector<8x128xf32>
    %24 = arith.subf %18, %23 : vector<8x128xf32>
    %25 = vector.extract_strided_slice %24 {offsets = [0, 0], sizes = [8, 10], strides = [1, 1]} : vector<8x128xf32> to vector<8x10xf32>
    %c0_13 = arith.constant 0 : index
    %c0_14 = arith.constant 0 : index
    %26 = vector.load %arg6[%c0_13, %c0_14] : memref<8x10xf32, #tpu.memory_space<vmem>>, vector<8x10xf32>
    tpu.vector_store %arg6[%c0_13, %c0_14], %25 {strides = array<i32>} : memref<8x10xf32, #tpu.memory_space<vmem>>, vector<8x10xf32>,
    return
  }
  func.func @transform_0(%arg0: i32) -> (i32, i32) {
    %c0_i32 = arith.constant 0 : i32
    %c0_i32_0 = arith.constant 0 : i32
    return %arg0, %c0_i32 : i32, i32
  }
  func.func @transform_1(%arg0: i32) -> (i32, i32) {
    %c0_i32 = arith.constant 0 : i32
    %c0_i32_0 = arith.constant 0 : i32
    %c0_i32_1 = arith.constant 0 : i32
    return %c0_i32, %c0_i32_0 : i32, i32
  }
  func.func @transform_2(%arg0: i32) -> (i32, i32) {
    %c0_i32 = arith.constant 0 : i32
    %c0_i32_0 = arith.constant 0 : i32
    %c0_i32_1 = arith.constant 0 : i32
    return %c0_i32, %c0_i32_0 : i32, i32
  }
  func.func @transform_3(%arg0: i32) -> (i32, i32) {
    %c0_i32 = arith.constant 0 : i32
    %c0_i32_0 = arith.constant 0 : i32
    %c0_i32_1 = arith.constant 0 : i32
    return %c0_i32, %c0_i32_0 : i32, i32
  }
  func.func @transform_4(%arg0: i32) -> (i32, i32) {
    %c0_i32 = arith.constant 0 : i32
    %c0_i32_0 = arith.constant 0 : i32
    %c0_i32_1 = arith.constant 0 : i32
    return %c0_i32, %c0_i32_0 : i32, i32
  }
  func.func @transform_5(%arg0: i32) -> (i32, i32) {
    %c0_i32 = arith.constant 0 : i32
    %c0_i32_0 = arith.constant 0 : i32
    return %arg0, %c0_i32 : i32, i32
  }
}

</mosaic_0001>

<llo_original>
// kernel: mlp_forward.1
$region0: #{mlp_forward.1}
  #allocation0 [shape = 'u32[]', space=smem, size = 0x4, offset = 0x4, fixed_abs, tag = 'smem constant byte address 0x4 - core index']
  #allocation1 [shape = 'u32[144,128]{1,0:T(1,128)}', space=vmem, size = 0x12000, scoped, tag = 'internal scratch']
  %s0 = inlined_call_operand.vmem [shape: f32[8,256], index: 0, kind: input, shape index: {}]
  %s1 = inlined_call_operand.hbm [shape: bf16[256,256], index: 1, kind: input, shape index: {}]
  %s2 = inlined_call_operand.vmem [shape: f32[1,256], index: 2, kind: input, shape index: {}]
  %s3 = inlined_call_operand.vmem [shape: bf16[256,128], index: 3, kind: input, shape index: {}]
  %s4 = inlined_call_operand.vmem [shape: f32[1,128], index: 4, kind: input, shape index: {}]
  %s5 = inlined_call_operand.hbm [shape: f32[8,10], index: 5, kind: output, shape index: {}]
  %s6 = sld [smem:[#allocation0]]
  $region34: #{mlp_forward.1} parent=0
    _
  %s8 = ssub.s32 1, %s6
  %s9 = scalar_select 0, %s8, %s6
  $region1: #{mlp_forward.1} parent=0
    #allocation2 [shape = 'u8[131072]{0}', space=vmem, size = 0x20000, scoped, tag = 'input window, operand 1, single buffered']
    #allocation3 [shape = 's32[1]{0}', space=sflag, size = 0x4, scoped, tag = 'scoped memory for mlp_forward.1']
    #allocation4 [shape = 's32[1]{0}', space=sflag, size = 0x4, scoped, tag = 'scoped memory for mlp_forward.1']
    #allocation5 [shape = 'u8[4096]{0}', space=vmem, size = 0x1000, scoped, tag = 'output window, operand 0, single buffered']
    %10 = vsyncpa [#allocation3], 0
    %11 = vsyncpa [#allocation4], 0
    // Predicated region
    $region2: #{mlp_forward.1} parent=1 // pred_check
      _
    $region3: #{mlp_forward.1} parent=1 // pred_check_branch
      %13 = sbr.rel (0) target = $region5
    $region4: #{mlp_forward.1} parent=1 // pred_region
      _
    $region5: #{mlp_forward.1} parent=1 // pred_fallthru
      _
    // Predicated region
    $region6: #{mlp_forward.1} parent=1 // pred_check
      _
    $region7: #{mlp_forward.1} parent=1 // pred_check_branch
      %15 = sbr.rel (0) target = $region9
    $region8: #{mlp_forward.1} parent=1 // pred_region
      %s17 = ssub.s32 4096, 4096
      %18 = vsyncadd [#allocation3], %s17
      %s19 = sshll.u32 [#allocation2], 4
      %s20 = int_to_ptr.vmem [resolvable:$true] %s19
      %25 = dma.hbm_to_vmem [thread:$0]  %s1, 4096, %s20, [#allocation3], 128, 128, 8
    $region9: #{mlp_forward.1} parent=1 // pred_fallthru
      _
    // Predicated region
    $region10: #{mlp_forward.1} parent=1 // pred_check
      _
    $region11: #{mlp_forward.1} parent=1 // pred_check_branch
      %27 = sbr.rel (0) target = $region13
    $region12: #{mlp_forward.1} parent=1 // pred_region
      _
    $region13: #{mlp_forward.1} parent=1 // pred_fallthru
      _
    // Predicated region
    $region14: #{mlp_forward.1} parent=1 // pred_check
      _
    $region15: #{mlp_forward.1} parent=1 // pred_check_branch
      %29 = sbr.rel (0) target = $region17
    $region16: #{mlp_forward.1} parent=1 // pred_region
      _
    $region17: #{mlp_forward.1} parent=1 // pred_fallthru
      _
    // Predicated region
    $region18: #{mlp_forward.1} parent=1 // pred_check
      _
    $region19: #{mlp_forward.1} parent=1 // pred_check_branch
      %31 = sbr.rel (0) target = $region21
    $region20: #{mlp_forward.1} parent=1 // pred_region
      _
    $region21: #{mlp_forward.1} parent=1 // pred_fallthru
      _
    // Predicated region
    $region22: #{mlp_forward.1} parent=1 // pred_check
      _
    $region23: #{mlp_forward.1} parent=1 // pred_check_branch
      %33 = sbr.rel (0) target = $region25
    $region24: #{mlp_forward.1} parent=1 // pred_region
      %34 = dma.done [#allocation3], 4096
    $region25: #{mlp_forward.1} parent=1 // pred_fallthru
      _
    %v36 = vld [vmem:[%s0] sm:$0xff]
    %v37 = vld [vmem:[%s0 + $0x8] sm:$0xff]
    %v38 = vpack.c.bf16 %v36, %v36
    %v39 = vpack.c.bf16 %v37, %v37
    %v40 = vld [vmem:[#allocation2] sm:$0xff]
    %v41 = vld [vmem:[#allocation2 + $0x8] sm:$0xff]
    %v42 = vld [vmem:[#allocation2 + $0x10] sm:$0xff]
    %v43 = vld [vmem:[#allocation2 + $0x18] sm:$0xff]
    %v44 = vld [vmem:[#allocation2 + $0x20] sm:$0xff]
    %v45 = vld [vmem:[#allocation2 + $0x28] sm:$0xff]
    %v46 = vld [vmem:[#allocation2 + $0x30] sm:$0xff]
    %v47 = vld [vmem:[#allocation2 + $0x38] sm:$0xff]
    %v48 = vld [vmem:[#allocation2 + $0x40] sm:$0xff]
    %v49 = vld [vmem:[#allocation2 + $0x48] sm:$0xff]
    %v50 = vld [vmem:[#allocation2 + $0x50] sm:$0xff]
    %v51 = vld [vmem:[#allocation2 + $0x58] sm:$0xff]
    %v52 = vld [vmem:[#allocation2 + $0x60] sm:$0xff]
    %v53 = vld [vmem:[#allocation2 + $0x68] sm:$0xff]
    %v54 = vld [vmem:[#allocation2 + $0x70] sm:$0xff]
    %v55 = vld [vmem:[#allocation2 + $0x78] sm:$0xff]
    %v56 = vld [vmem:[#allocation2 + $0x80] sm:$0xff]
    %v57 = vld [vmem:[#allocation2 + $0x88] sm:$0xff]
    %v58 = vld [vmem:[#allocation2 + $0x90] sm:$0xff]
    %v59 = vld [vmem:[#allocation2 + $0x98] sm:$0xff]
    %v60 = vld [vmem:[#allocation2 + $0xa0] sm:$0xff]
    %v61 = vld [vmem:[#allocation2 + $0xa8] sm:$0xff]
    %v62 = vld [vmem:[#allocation2 + $0xb0] sm:$0xff]
    %v63 = vld [vmem:[#allocation2 + $0xb8] sm:$0xff]
    %v64 = vld [vmem:[#allocation2 + $0xc0] sm:$0xff]
    %v65 = vld [vmem:[#allocation2 + $0xc8] sm:$0xff]
    %v66 = vld [vmem:[#allocation2 + $0xd0] sm:$0xff]
    %v67 = vld [vmem:[#allocation2 + $0xd8] sm:$0xff]
    %v68 = vld [vmem:[#allocation2 + $0xe0] sm:$0xff]
    %v69 = vld [vmem:[#allocation2 + $0xe8] sm:$0xff]
    %v70 = vld [vmem:[#allocation2 + $0xf0] sm:$0xff]
    %v71 = vld [vmem:[#allocation2 + $0xf8] sm:$0xff]
    %v72 = vld [vmem:[%s2] sm:$0x3]
    %v74 = vlaneseq
    %v75 = vshrl.u32 %v74, 7
    %v76 = vsub.s32 0, %v75
    %v77 = vrot.slane %v72, %v76
    %v78 = vlaneseq
    %v79 = vshrl.u32 %v78, 7
    %v80 = vsub.s32 1, %v79
    %v81 = vrot.slane %v72, %v80
    %v116 = vunpack.c.l.b16 %v40
    %v117 = vunpack.c.h.b16 %v40
    %v118 = vunpack.c.l.b16 %v41
    %v119 = vunpack.c.h.b16 %v41
    %v120 = vunpack.c.l.b16 %v42
    %v121 = vunpack.c.h.b16 %v42
    %v122 = vunpack.c.l.b16 %v43
    %v123 = vunpack.c.h.b16 %v43
    %v124 = vunpack.c.l.b16 %v44
    %v125 = vunpack.c.h.b16 %v44
    %v126 = vunpack.c.l.b16 %v45
    %v127 = vunpack.c.h.b16 %v45
    %v128 = vunpack.c.l.b16 %v46
    %v129 = vunpack.c.h.b16 %v46
    %v130 = vunpack.c.l.b16 %v47
    %v131 = vunpack.c.h.b16 %v47
    %v132 = vunpack.c.l.b16 %v48
    %v133 = vunpack.c.h.b16 %v48
    %v134 = vunpack.c.l.b16 %v49
    %v135 = vunpack.c.h.b16 %v49
    %v136 = vunpack.c.l.b16 %v50
    %v137 = vunpack.c.h.b16 %v50
    %v138 = vunpack.c.l.b16 %v51
    %v139 = vunpack.c.h.b16 %v51
    %v140 = vunpack.c.l.b16 %v52
    %v141 = vunpack.c.h.b16 %v52
    %v142 = vunpack.c.l.b16 %v53
    %v143 = vunpack.c.h.b16 %v53
    %v144 = vunpack.c.l.b16 %v54
    %v145 = vunpack.c.h.b16 %v54
    %v146 = vunpack.c.l.b16 %v55
    %v147 = vunpack.c.h.b16 %v55
    %v148 = vunpack.c.l.b16 %v56
    %v149 = vunpack.c.h.b16 %v56
    %v150 = vunpack.c.l.b16 %v57
    %v151 = vunpack.c.h.b16 %v57
    %v152 = vunpack.c.l.b16 %v58
    %v153 = vunpack.c.h.b16 %v58
    %v154 = vunpack.c.l.b16 %v59
    %v155 = vunpack.c.h.b16 %v59
    %v156 = vunpack.c.l.b16 %v60
    %v157 = vunpack.c.h.b16 %v60
    %v158 = vunpack.c.l.b16 %v61
    %v159 = vunpack.c.h.b16 %v61
    %v160 = vunpack.c.l.b16 %v62
    %v161 = vunpack.c.h.b16 %v62
    %v162 = vunpack.c.l.b16 %v63
    %v163 = vunpack.c.h.b16 %v63
    %v164 = vunpack.c.l.b16 %v64
    %v165 = vunpack.c.h.b16 %v64
    %v166 = vunpack.c.l.b16 %v65
    %v167 = vunpack.c.h.b16 %v65
    %v168 = vunpack.c.l.b16 %v66
    %v169 = vunpack.c.h.b16 %v66
    %v170 = vunpack.c.l.b16 %v67
    %v171 = vunpack.c.h.b16 %v67
    %v172 = vunpack.c.l.b16 %v68
    %v173 = vunpack.c.h.b16 %v68
    %v174 = vunpack.c.l.b16 %v69
    %v175 = vunpack.c.h.b16 %v69
    %v176 = vunpack.c.l.b16 %v70
    %v177 = vunpack.c.h.b16 %v70
    %v178 = vunpack.c.l.b16 %v71
    %v179 = vunpack.c.h.b16 %v71
    %v180 = vpack.c.b16 %v118, %v116
    %v181 = vpack.c.b16 %v119, %v117
    %v182 = vpack.c.b16 %v122, %v120
    %v183 = vpack.c.b16 %v123, %v121
    %v184 = vpack.c.b16 %v126, %v124
    %v185 = vpack.c.b16 %v127, %v125
    %v186 = vpack.c.b16 %v130, %v128
    %v187 = vpack.c.b16 %v131, %v129
    %v188 = vpack.c.b16 %v134, %v132
    %v189 = vpack.c.b16 %v135, %v133
    %v190 = vpack.c.b16 %v138, %v136
    %v191 = vpack.c.b16 %v139, %v137
    %v192 = vpack.c.b16 %v142, %v140
    %v193 = vpack.c.b16 %v143, %v141
    %v194 = vpack.c.b16 %v146, %v144
    %v195 = vpack.c.b16 %v147, %v145
    %v196 = vpack.c.b16 %v150, %v148
    %v197 = vpack.c.b16 %v151, %v149
    %v198 = vpack.c.b16 %v154, %v152
    %v199 = vpack.c.b16 %v155, %v153
    %v200 = vpack.c.b16 %v158, %v156
    %v201 = vpack.c.b16 %v159, %v157
    %v202 = vpack.c.b16 %v162, %v160
    %v203 = vpack.c.b16 %v163, %v161
    %v204 = vpack.c.b16 %v166, %v164
    %v205 = vpack.c.b16 %v167, %v165
    %v206 = vpack.c.b16 %v170, %v168
    %v207 = vpack.c.b16 %v171, %v169
    %v208 = vpack.c.b16 %v174, %v172
    %v209 = vpack.c.b16 %v175, %v173
    %v210 = vpack.c.b16 %v178, %v176
    %v211 = vpack.c.b16 %v179, %v177
    %244 = vmatprep.subr.bf16.mxu0 %v195
    %245 = vmatpush1.bf16.msra.mxu0 %v194
    %246 = vmatprep.subr.bf16.mxu0 %v193
    %247 = vmatpush1.bf16.msra.mxu0 %v192
    %248 = vmatprep.subr.bf16.mxu0 %v191
    %249 = vmatpush1.bf16.msra.mxu0 %v190
    %250 = vmatprep.subr.bf16.mxu0 %v189
    %251 = vmatpush1.bf16.msra.mxu0 %v188
    %252 = vmatprep.subr.bf16.mxu0 %v187
    %253 = vmatpush1.bf16.msra.mxu0 %v186
    %254 = vmatprep.subr.bf16.mxu0 %v185
    %255 = vmatpush1.bf16.msra.mxu0 %v184
    %256 = vmatprep.subr.bf16.mxu0 %v183
    %257 = vmatpush1.bf16.msra.mxu0 %v182
    %258 = vmatprep.subr.bf16.mxu0 %v181
    %259 = vmatpush1.bf16.msra.mxu0 %v180
    %260 = vmatprep.subr.bf16.mxu0 %v211
    %261 = vmatpush2.bf16.msra.mxu0 %v210
    %262 = vmatprep.subr.bf16.mxu0 %v209
    %263 = vmatpush2.bf16.msra.mxu0 %v208
    %264 = vmatprep.subr.bf16.mxu0 %v207
    %265 = vmatpush2.bf16.msra.mxu0 %v206
    %266 = vmatprep.subr.bf16.mxu0 %v205
    %267 = vmatpush2.bf16.msra.mxu0 %v204
    %268 = vmatprep.subr.bf16.mxu0 %v203
    %269 = vmatpush2.bf16.msra.mxu0 %v202
    %270 = vmatprep.subr.bf16.mxu0 %v201
    %271 = vmatpush2.bf16.msra.mxu0 %v200
    %272 = vmatprep.subr.bf16.mxu0 %v199
    %273 = vmatpush2.bf16.msra.mxu0 %v198
    %274 = vmatprep.subr.bf16.mxu0 %v197
    %275 = vmatpush2.bf16.msra.mxu0 %v196
    %276 = vmatprep.mubr.bf16.mxu0 %v39
    %277 = vmatmul.mubr.bf16.gmra.mxu0 %v38
    %v278 = vpop.f32.mrf.mxu0
    %v279 = vadd.f32 %v77, %v278
    %v280 = vpop.f32.mrf.mxu0
    %v281 = vadd.f32 %v81, %v280
    %v282 = vpop.f32.mrf.mxu0
    %v283 = vpop.f32.mrf.mxu0
    %284 = vdwg.mxu0
    %v285 = vmax.f32 %v279, 0.0
    %v286 = vmax.f32 %v281, 0.0
    %v287 = vpack.c.bf16 %v285, %v285
    %v288 = vpack.c.bf16 %v286, %v286
    %v289 = vld [vmem:[%s3] sm:$0xf]
    %v290 = vld [vmem:[%s3 + $0x4] sm:$0xf]
    %v291 = vld [vmem:[%s3 + $0x8] sm:$0xf]
    %v292 = vld [vmem:[%s3 + $0xc] sm:$0xf]
    %v293 = vld [vmem:[%s3 + $0x10] sm:$0xf]
    %v294 = vld [vmem:[%s3 + $0x14] sm:$0xf]
    %v295 = vld [vmem:[%s3 + $0x18] sm:$0xf]
    %v296 = vld [vmem:[%s3 + $0x1c] sm:$0xf]
    %v297 = vld [vmem:[%s3 + $0x20] sm:$0xf]
    %v298 = vld [vmem:[%s3 + $0x24] sm:$0xf]
    %v299 = vld [vmem:[%s3 + $0x28] sm:$0xf]
    %v300 = vld [vmem:[%s3 + $0x2c] sm:$0xf]
    %v301 = vld [vmem:[%s3 + $0x30] sm:$0xf]
    %v302 = vld [vmem:[%s3 + $0x34] sm:$0xf]
    %v303 = vld [vmem:[%s3 + $0x38] sm:$0xf]
    %v304 = vld [vmem:[%s3 + $0x3c] sm:$0xf]
    %v305 = vld [vmem:[%s3 + $0x40] sm:$0xf]
    %v306 = vld [vmem:[%s3 + $0x44] sm:$0xf]
    %v307 = vld [vmem:[%s3 + $0x48] sm:$0xf]
    %v308 = vld [vmem:[%s3 + $0x4c] sm:$0xf]
    %v309 = vld [vmem:[%s3 + $0x50] sm:$0xf]
    %v310 = vld [vmem:[%s3 + $0x54] sm:$0xf]
    %v311 = vld [vmem:[%s3 + $0x58] sm:$0xf]
    %v312 = vld [vmem:[%s3 + $0x5c] sm:$0xf]
    %v313 = vld [vmem:[%s3 + $0x60] sm:$0xf]
    %v314 = vld [vmem:[%s3 + $0x64] sm:$0xf]
    %v315 = vld [vmem:[%s3 + $0x68] sm:$0xf]
    %v316 = vld [vmem:[%s3 + $0x6c] sm:$0xf]
    %v317 = vld [vmem:[%s3 + $0x70] sm:$0xf]
    %v318 = vld [vmem:[%s3 + $0x74] sm:$0xf]
    %v319 = vld [vmem:[%s3 + $0x78] sm:$0xf]
    %v320 = vld [vmem:[%s3 + $0x7c] sm:$0xf]
    %v321 = vld [vmem:[%s4] sm:$0x1]
    %v323 = vlaneseq
    %v324 = vshrl.u32 %v323, 7
    %v325 = vsub.s32 0, %v324
    %v326 = vrot.slane %v321, %v325
    %v360 = vunpack.c.l.b16 %v289
    %v361 = vunpack.c.l.b16 %v290
    %v362 = vunpack.c.l.b16 %v291
    %v363 = vunpack.c.l.b16 %v292
    %v364 = vunpack.c.l.b16 %v293
    %v365 = vunpack.c.l.b16 %v294
    %v366 = vunpack.c.l.b16 %v295
    %v367 = vunpack.c.l.b16 %v296
    %v368 = vunpack.c.l.b16 %v297
    %v369 = vunpack.c.l.b16 %v298
    %v370 = vunpack.c.l.b16 %v299
    %v371 = vunpack.c.l.b16 %v300
    %v372 = vunpack.c.l.b16 %v301
    %v373 = vunpack.c.l.b16 %v302
    %v374 = vunpack.c.l.b16 %v303
    %v375 = vunpack.c.l.b16 %v304
    %v376 = vunpack.c.l.b16 %v305
    %v377 = vunpack.c.l.b16 %v306
    %v378 = vunpack.c.l.b16 %v307
    %v379 = vunpack.c.l.b16 %v308
    %v380 = vunpack.c.l.b16 %v309
    %v381 = vunpack.c.l.b16 %v310
    %v382 = vunpack.c.l.b16 %v311
    %v383 = vunpack.c.l.b16 %v312
    %v384 = vunpack.c.l.b16 %v313
    %v385 = vunpack.c.l.b16 %v314
    %v386 = vunpack.c.l.b16 %v315
    %v387 = vunpack.c.l.b16 %v316
    %v388 = vunpack.c.l.b16 %v317
    %v389 = vunpack.c.l.b16 %v318
    %v390 = vunpack.c.l.b16 %v319
    %v391 = vunpack.c.l.b16 %v320
    %v392 = vpack.c.b16 %v361, %v360
    %v393 = vpack.c.b16 %v363, %v362
    %v394 = vpack.c.b16 %v365, %v364
    %v395 = vpack.c.b16 %v367, %v366
    %v396 = vpack.c.b16 %v369, %v368
    %v397 = vpack.c.b16 %v371, %v370
    %v398 = vpack.c.b16 %v373, %v372
    %v399 = vpack.c.b16 %v375, %v374
    %v400 = vpack.c.b16 %v377, %v376
    %v401 = vpack.c.b16 %v379, %v378
    %v402 = vpack.c.b16 %v381, %v380
    %v403 = vpack.c.b16 %v383, %v382
    %v404 = vpack.c.b16 %v385, %v384
    %v405 = vpack.c.b16 %v387, %v386
    %v406 = vpack.c.b16 %v389, %v388
    %v407 = vpack.c.b16 %v391, %v390
    %424 = vmatprep.subr.bf16.mxu0 0
    %425 = vmatpush1.bf16.msra.mxu0 %v399
    %426 = vmatprep.subr.bf16.mxu0 0
    %427 = vmatpush1.bf16.msra.mxu0 %v398
    %428 = vmatprep.subr.bf16.mxu0 0
    %429 = vmatpush1.bf16.msra.mxu0 %v397
    %430 = vmatprep.subr.bf16.mxu0 0
    %431 = vmatpush1.bf16.msra.mxu0 %v396
    %432 = vmatprep.subr.bf16.mxu0 0
    %433 = vmatpush1.bf16.msra.mxu0 %v395
    %434 = vmatprep.subr.bf16.mxu0 0
    %435 = vmatpush1.bf16.msra.mxu0 %v394
    %436 = vmatprep.subr.bf16.mxu0 0
    %437 = vmatpush1.bf16.msra.mxu0 %v393
    %438 = vmatprep.subr.bf16.mxu0 0
    %439 = vmatpush1.bf16.msra.mxu0 %v392
    %440 = vmatprep.subr.bf16.mxu0 0
    %441 = vmatpush2.bf16.msra.mxu0 %v407
    %442 = vmatprep.subr.bf16.mxu0 0
    %443 = vmatpush2.bf16.msra.mxu0 %v406
    %444 = vmatprep.subr.bf16.mxu0 0
    %445 = vmatpush2.bf16.msra.mxu0 %v405
    %446 = vmatprep.subr.bf16.mxu0 0
    %447 = vmatpush2.bf16.msra.mxu0 %v404
    %448 = vmatprep.subr.bf16.mxu0 0
    %449 = vmatpush2.bf16.msra.mxu0 %v403
    %450 = vmatprep.subr.bf16.mxu0 0
    %451 = vmatpush2.bf16.msra.mxu0 %v402
    %452 = vmatprep.subr.bf16.mxu0 0
    %453 = vmatpush2.bf16.msra.mxu0 %v401
    %454 = vmatprep.subr.bf16.mxu0 0
    %455 = vmatpush2.bf16.msra.mxu0 %v400
    %456 = vmatprep.mubr.bf16.mxu0 %v288
    %457 = vmatmul.mubr.bf16.gmra.mxu0 %v287
    %v458 = vpop.f32.mrf.mxu0
    %v459 = vadd.f32 %v326, %v458
    %v460 = vpop.f32.mrf.mxu0
    %v461 = vpop.f32.mrf.mxu0
    %v462 = vpop.f32.mrf.mxu0
    %463 = vdwg.mxu0
    %464 = vmax.xlane.f32.xlu0 %v459
    %v465 = vpop.xlane.xlu0 %464
    %v466 = vsub.f32 %v459, %v465
    %v467 = vmul.f32 %v466, 1.442695
    %v468 = vpow.pop %v467
    %469 = vadd.xlane.f32.xlu0 %v468
    %v470 = vpop.xlane.xlu0 %469
    %v471 = vlog2.pop %v470
    %v472 = vmul.f32 %v471, 0.6931472
    %v473 = vsub.f32 %v466, %v472
    %vm474 = vcmask 80896
    %475 = vst.msk [vmem:[#allocation5] sm:$0xff] %vm474, %v473
    // Predicated region
    $region26: #{mlp_forward.1} parent=1 // pred_check
      _
    $region27: #{mlp_forward.1} parent=1 // pred_check_branch
      %477 = sbr.rel (0) target = $region29
    $region28: #{mlp_forward.1} parent=1 // pred_region
      %s479 = ssub.s32 128, 128
      %480 = vsyncadd [#allocation4], %s479
      %s482 = sshll.u32 [#allocation5], 4
      %s483 = int_to_ptr.vmem [resolvable:$true] %s482
      %485 = dma.vmem_to_hbm [thread:$0]  %s483, 128, %s5, [#allocation4]
    $region29: #{mlp_forward.1} parent=1 // pred_fallthru
      _
    // Predicated region
    $region30: #{mlp_forward.1} parent=1 // pred_check
      _
    $region31: #{mlp_forward.1} parent=1 // pred_check_branch
      %487 = sbr.rel (0) target = $region33
    $region32: #{mlp_forward.1} parent=1 // pred_region
      %488 = dma.done [#allocation4], 128
    $region33: #{mlp_forward.1} parent=1 // pred_fallthru
      _
    %489 = vsyncpa [#allocation3], 1
    %490 = vsyncpa [#allocation4], 1

</llo_original>
